<compile_context>
chip_gen: v7x
topology: tpu7x:2x2x1
jax: 0.10.0
libtpu: 0.0.40
codegen_flags: <defaults>
</compile_context>

<pallas_src>
import functools

import jax
import jax.numpy as jnp
from jax import lax
from jax.experimental import pallas as pl
from jax.experimental.pallas import tpu as pltpu


def _round_up(a, b):
    return (a + b - 1) // b * b


# ---------------------------------------------------------------------------
# Pass 1: indices = clamp(trunc(mean(x, -1)), 0, V-1)
# ---------------------------------------------------------------------------
def _index_kernel(x_ref, idx_ref, *, num_embeddings):
    # x_ref:   (tile_n, T)  float32
    # idx_ref: (tile_n, 1)  int32
    x = x_ref[...]
    mean = jnp.mean(x, axis=-1, keepdims=True)          # (tile_n, 1) f32
    # f32 -> s32 conversion truncates toward zero, exactly like torch .long();
    # no jnp.trunc needed.
    idx = mean.astype(jnp.int32)
    # nn.Embedding would raise on out-of-range indices; we clamp instead so the
    # kernel never produces garbage addresses for the DMA gather.
    idx_ref[...] = jnp.clip(idx, 0, num_embeddings - 1)


# ---------------------------------------------------------------------------
# Pass 2: DMA-gather the selected rows from the HBM-resident table.
# ---------------------------------------------------------------------------
def _gather_kernel(idx_ref, emb_ref, o_ref, buf, sem, *, tile):
    # idx_ref: (N_pad,) int32 in SMEM  (scalar prefetch)
    # emb_ref: (V, D)  in HBM (memory_space=pl.ANY) -- never fully loaded to VMEM
    # o_ref:   (tile, D) VMEM output block
    # buf:     (tile, D) VMEM scratch (gather landing buffer)
    # sem:     (tile,)   DMA semaphores
    base = pl.program_id(0) * tile

    def _start(r, carry):
        row = idx_ref[base + r]
        pltpu.make_async_copy(emb_ref.at[row], buf.at[r], sem.at[r]).start()
        return carry

    # Issue all row DMAs for this tile; they proceed concurrently.
    lax.fori_loop(0, tile, _start, 0)

    def _wait(r, carry):
        # Source slice only provides the transfer shape for the wait.
        pltpu.make_async_copy(emb_ref.at[0], buf.at[r], sem.at[r]).wait()
        return carry

    lax.fori_loop(0, tile, _wait, 0)

    # Lane-dense vector copy into the pipelined output block (D=128 in the demo).
    o_ref[...] = buf[...]


# ---------------------------------------------------------------------------
# Wrapper
# ---------------------------------------------------------------------------
def embedding_wrapper_forward(x, emb_table, *, tile_n=128):
    """x: (B, S, T) float32; emb_table: (V, D) -> (B, S, D)."""
    B, S, T = x.shape
    V, D = emb_table.shape
    N = B * S

    # Rows per grid step: big enough to amortize per-step overhead, capped for
    # tiny problems (kept a multiple of 8 for the sublane constraint).
    tile = min(tile_n, _round_up(N, 8))
    n_pad = _round_up(N, tile)

    x2 = x.reshape(N, T)
    if n_pad != N:
        x2 = jnp.pad(x2, ((0, n_pad - N), (0, 0)))  # padded rows -> idx 0, discarded later

    # VMEM use is tiny in this design (a few (tile, D) buffers); the default
    # scoped limits are never a constraint, but we set it explicitly.
    cparams = pltpu.CompilerParams(
        dimension_semantics=("parallel",),
        vmem_limit_bytes=32 * 1024 * 1024,
    )

    # ---- Pass 1: indices -------------------------------------------------
    idx = pl.pallas_call(
        functools.partial(_index_kernel, num_embeddings=V),
        out_shape=jax.ShapeDtypeStruct((n_pad, 1), jnp.int32),
        grid_spec=pltpu.PrefetchScalarGridSpec(
            num_scalar_prefetch=0,
            grid=(n_pad // tile,),
            in_specs=[pl.BlockSpec((tile, T), lambda i: (i, 0))],
            out_specs=pl.BlockSpec((tile, 1), lambda i: (i, 0)),
        ),
        compiler_params=cparams,
    )(x2)
    idx = idx.reshape(n_pad)

    # ---- Pass 2: row gather ------------------------------------------------
    out = pl.pallas_call(
        functools.partial(_gather_kernel, tile=tile),
        out_shape=jax.ShapeDtypeStruct((n_pad, D), emb_table.dtype),
        grid_spec=pltpu.PrefetchScalarGridSpec(
            num_scalar_prefetch=1,                       # idx -> SMEM
            grid=(n_pad // tile,),
            in_specs=[pl.BlockSpec(memory_space=pl.ANY)],  # table stays in HBM
            out_specs=pl.BlockSpec((tile, D), lambda i, idx_ref: (i, 0)),
            scratch_shapes=[
                pltpu.VMEM((tile, D), emb_table.dtype),
                pltpu.SemaphoreType.DMA((tile,)),
            ],
        ),
        compiler_params=cparams,
    )(idx, emb_table)

    return out[:N].reshape(B, S, D)


def _reference_forward(x, emb_table):
    # Pure-JAX reference of the PyTorch semantics (mean -> .long() -> Embedding).
    V = emb_table.shape[0]
    idx = jnp.mean(x, axis=-1).astype(jnp.int32)
    idx = jnp.clip(idx, 0, V - 1)
    return jnp.take(emb_table, idx, axis=0)


if __name__ == "__main__":
    key = jax.random.PRNGKey(0)
    k_i, k_u, k_e = jax.random.split(key, 3)

    B, S, T = 2, 128, 16     # batch, seq, trailing (averaged) axis
    V, D = 64, 128           # num_embeddings, embedding_dim (D=128 -> lane-dense)

    # Construct x so each row's mean sits safely inside an integer bucket
    # (margin >= 0.25), so kernel vs. reference reduction order cannot flip the index.
    target = jax.random.randint(k_i, (B, S, 1), 0, V).astype(jnp.float32)
    noise = jax.random.uniform(k_u, (B, S, T), dtype=jnp.float32, minval=0.25, maxval=0.75)
    x = target + noise

    # Deterministic synthetic embedding weight (matches nn.Embedding(V, D) shape).
    emb_table = jax.random.normal(k_e, (V, D), dtype=jnp.float32)

    y = embedding_wrapper_forward(x, emb_table)
    y = jax.block_until_ready(y)

    y_ref = _reference_forward(x, emb_table)
    assert y.shape == (B, S, D)
    assert jnp.allclose(y, y_ref, atol=1e-5, rtol=1e-5), "mismatch vs reference"

    # TODO(synk): `invert()` (decoder path of the embedding module) is not part of
    # forward() and is not implemented here.
    print("KERNEL_OK")
</pallas_src>

<mosaic_0001>
module attributes {stable_mosaic.version = 11 : i64} {
  func.func @_index_kernel(%arg0: i32, %arg1: memref<128x16xf32, #tpu.memory_space<vmem>>, %arg2: memref<128x1xi32, #tpu.memory_space<vmem>>) attributes {dimension_semantics = [#tpu.dimension_semantics<parallel>], iteration_bounds = array<i64: 2>, scalar_prefetch = 0 : i64, scratch_operands = 0 : i64, tpu.core_type = #tpu.core_type<tc>, window_params = [{transform_indices = @transform_0, window_bounds = array<i64: 128, 16>}, {transform_indices = @transform_1, window_bounds = array<i64: 128, 1>}]} {
    %c0 = arith.constant 0 : index
    %c0_0 = arith.constant 0 : index
    %0 = vector.load %arg1[%c0, %c0_0] : memref<128x16xf32, #tpu.memory_space<vmem>>, vector<128x16xf32>
    %cst = arith.constant dense<0.000000e+00> : vector<128xf32>
    %1 = vector.multi_reduction <add>, %0, %cst [1] : vector<128x16xf32> to vector<128xf32>
    %2 = vector.shape_cast %1 : vector<128xf32> to vector<128x1xf32>
    %cst_1 = arith.constant 1.600000e+01 : f32
    %3 = vector.broadcast %cst_1 : f32 to vector<128x1xf32>
    %4 = arith.divf %2, %3 : vector<128x1xf32>
    %5 = arith.fptosi %4 : vector<128x1xf32> to vector<128x1xi32>
    %c0_i32 = arith.constant 0 : i32
    %c63_i32 = arith.constant 63 : i32
    %6 = vector.broadcast %c0_i32 : i32 to vector<128x1xi32>
    %7 = arith.maxsi %6, %5 : vector<128x1xi32>
    %8 = vector.broadcast %c63_i32 : i32 to vector<128x1xi32>
    %9 = arith.minsi %8, %7 : vector<128x1xi32>
    %c0_2 = arith.constant 0 : index
    %c0_3 = arith.constant 0 : index
    %10 = vector.load %arg2[%c0_2, %c0_3] : memref<128x1xi32, #tpu.memory_space<vmem>>, vector<128x1xi32>
    tpu.vector_store %arg2[%c0_2, %c0_3], %9 {strides = array<i32>} : memref<128x1xi32, #tpu.memory_space<vmem>>, vector<128x1xi32>,
    return
  }
  func.func @transform_0(%arg0: i32) -> (i32, i32) {
    %c0_i32 = arith.constant 0 : i32
    %c0_i32_0 = arith.constant 0 : i32
    return %arg0, %c0_i32 : i32, i32
  }
  func.func @transform_1(%arg0: i32) -> (i32, i32) {
    %c0_i32 = arith.constant 0 : i32
    %c0_i32_0 = arith.constant 0 : i32
    return %arg0, %c0_i32 : i32, i32
  }
}

</mosaic_0001>

<llo_original>
// kernel: tpu_custom_call.1
$region0: #{tpu_custom_call.1}
  #allocation0 [shape = 'u32[]', space=smem, size = 0x4, offset = 0x4, fixed_abs, tag = 'smem constant byte address 0x4 - core index']
  #allocation1 [shape = 'u32[144,128]{1,0:T(1,128)}', space=vmem, size = 0x12000, scoped, tag = 'internal scratch']
  %s0 = inlined_call_operand.vmem [shape: f32[256,16], index: 0, kind: input, shape index: {}]
  %s1 = inlined_call_operand.vmem [shape: s32[256,1], index: 1, kind: output, shape index: {}]
  %s2 = sld [smem:[#allocation0]]
  $region37: #{tpu_custom_call.1} parent=0
    _
  %s4 = ssub.s32 1, %s2
  %s5 = scalar_select 0, %s4, %s2
  loop: start=0, step=1, limit=4
  $region2: #{tpu_custom_call.1} parent=0 // loop_pre_header
    _
  $region3: #{tpu_custom_call.1} parent=0 // loop_header
    %s7 = sphi 0, %s11
    %p8 = scmp.ge.s32.totalorder %s7, 4
    %s17 = sphi 0, %s19
    %s20 = sphi 0, %s17
    %s21 = sphi 0, %s20
    %s37 = sphi 0, %s21
    %s43 = sphi 0, %s45
    %s46 = sphi 0, %s43
    %s47 = sphi 0, %s46
    %s63 = sphi 0, %s47
  $region4: #{tpu_custom_call.1} parent=0 // loop_header_branch
    %10 = sbr.rel (%p8) target = $region8
  $region5: #{tpu_custom_call.1} parent=0 // loop_body
    %s12 = ssub.s32 %s7, 1
    %s13 = ssub.s32 %s7, 2
    %s14 = sadd.s32 %s7, 1
    %s15 = ssub.s32 %s7, %s14
    %p16 = scmp.eq.s32.totalorder %s15, 0
    %s18 = sadd.s32 %s17, 1
    %s19 = scalar_select %p16, %s17, %s18
    %p22 = pneg %p16
    %p23 = scmp.eq.s32.totalorder %s7, 1
    %p24 = por %p22, %p23
    %p25 = scmp.ne.s32.totalorder %s17, %s20
    %p26 = scmp.eq.s32.totalorder %s7, 0
    %p27 = por %p25, %p26
    %p28 = scmp.ne.s32.totalorder %s17, %s20
    %p29 = scmp.eq.s32.totalorder %s12, 1
    %p30 = por %p28, %p29
    %p31 = scmp.ne.s32.totalorder %s20, %s21
    %p32 = scmp.eq.s32.totalorder %s12, 0
    %p33 = por %p31, %p32
    %p34 = scmp.ne.s32.totalorder %s20, %s21
    %p35 = scmp.eq.s32.totalorder %s13, 1
    %p36 = por %p34, %p35
    %p38 = scmp.ne.s32.totalorder %s21, %s37
    %p39 = scmp.eq.s32.totalorder %s13, 0
    %p40 = por %p38, %p39
    %s41 = ssub.s32 %s7, %s14
    %p42 = scmp.eq.s32.totalorder %s41, 0
    %s44 = sadd.s32 %s43, 1
    %s45 = scalar_select %p42, %s43, %s44
    %p48 = pneg %p42
    %p49 = scmp.eq.s32.totalorder %s7, 1
    %p50 = por %p48, %p49
    %p51 = scmp.ne.s32.totalorder %s43, %s46
    %p52 = scmp.eq.s32.totalorder %s7, 0
    %p53 = por %p51, %p52
    %p54 = scmp.ne.s32.totalorder %s43, %s46
    %p55 = scmp.eq.s32.totalorder %s12, 1
    %p56 = por %p54, %p55
    %p57 = scmp.ne.s32.totalorder %s46, %s47
    %p58 = scmp.eq.s32.totalorder %s12, 0
    %p59 = por %p57, %p58
    %p60 = scmp.ne.s32.totalorder %s46, %s47
    %p61 = scmp.eq.s32.totalorder %s13, 1
    %p62 = por %p60, %p61
    %p64 = scmp.ne.s32.totalorder %s47, %s63
    %p65 = scmp.eq.s32.totalorder %s13, 0
    %p66 = por %p64, %p65
    %p67 = scmp.le.s32.totalorder 1, %s7
    %p68 = scmp.lt.s32.totalorder %s7, 3
    %p69 = pnand %p67, %p68
    %p70 = pneg %p69
    // Predicated region
    $region9: #{tpu_custom_call.1} parent=5 // pred_check
      _
    $region10: #{tpu_custom_call.1} parent=5 // pred_check_branch
      %72 = sbr.rel (%p69) target = $region12
    $region11: #{tpu_custom_call.1} parent=5 // pred_region
      %s73 = ssub.s32 %s7, 1
    $region12: #{tpu_custom_call.1} parent=5 // pred_fallthru
      _
    %p74 = scmp.lt.s32.totalorder %s7, 2
    // Predicated region
    $region13: #{tpu_custom_call.1} parent=5 // pred_check
      %p75 = pneg %p74
    $region14: #{tpu_custom_call.1} parent=5 // pred_check_branch
      %77 = sbr.rel (%p75) target = $region16
    $region15: #{tpu_custom_call.1} parent=5 // pred_region
      // Predicated region
      $region17: #{tpu_custom_call.1} parent=15 // pred_check
        %p78 = pneg %p27
      $region18: #{tpu_custom_call.1} parent=15 // pred_check_branch
        %80 = sbr.rel (%p78) target = $region20
      $region19: #{tpu_custom_call.1} parent=15 // pred_region
        %s81 = smul.u32 16, %s7
        %p82 = scmp.lt.s32.totalorder %s81, 31
        %s83 = scalar_select %p82, %s81, 31
        %s84 = smul.addr %s83, 8
        %s85 = scalar_lea.vmem %s0, %s84
        %s86 = smul.u32 16, %s7
      $region20: #{tpu_custom_call.1} parent=15 // pred_fallthru
        _
    $region16: #{tpu_custom_call.1} parent=5 // pred_fallthru
      _
    %p87 = scmp.le.s32.totalorder 1, %s7
    %p88 = scmp.lt.s32.totalorder %s7, 3
    %p89 = pnand %p87, %p88
    %p90 = pneg %p89
    // Predicated region
    $region21: #{tpu_custom_call.1} parent=5 // pred_check
      _
    $region22: #{tpu_custom_call.1} parent=5 // pred_check_branch
      %92 = sbr.rel (%p89) target = $region24
    $region23: #{tpu_custom_call.1} parent=5 // pred_region
      %s93 = ssub.s32 %s7, 1
      %s94 = smul.u32 16, %s12
      %p95 = scmp.lt.s32.totalorder %s94, 31
      %s96 = scalar_select %p95, %s94, 31
      %s97 = smul.addr %s96, 8
      %s98 = scalar_lea.vmem %s0, %s97
      %p99 = pneg %p33
      %p100 = pneg %p30
      %p101 = pneg %p59
      %p102 = pneg %p56
      %s103 = smul.u32 16, %s12
      %p104 = scmp.lt.s32.totalorder %s103, 31
      %s105 = scalar_select %p104, %s103, 31
      %s106 = smul.addr %s105, 8
      %s107 = scalar_lea.vmem %s1, %s106
      %s108 = smul.u32 16, %s12
      %p109 = scmp.lt.s32.totalorder %s108, 31
      %s110 = scalar_select %p109, %s108, 31
      %s111 = smul.addr %s110, 8
      %s112 = scalar_lea.vmem %s0, %s111
      %s113 = smul.u32 16, %s12
      %s114 = smul.u32 16, %s12
      %p115 = scmp.lt.s32.totalorder %s114, 31
      %s116 = scalar_select %p115, %s114, 31
      %s117 = smul.addr %s116, 8
      %s118 = scalar_lea.vmem %s1, %s117
      %s119 = smul.u32 16, %s12
      %v120 = vld [vmem:[%s112] sm:$0xff]
      %v121 = vld [vmem:[%s112 + $0x8] sm:$0xff]
      %v122 = vld [vmem:[%s112 + $0x10] sm:$0xff]
      %v123 = vld [vmem:[%s112 + $0x18] sm:$0xff]
      %v124 = vld [vmem:[%s112 + $0x20] sm:$0xff]
      %v125 = vld [vmem:[%s112 + $0x28] sm:$0xff]
      %v126 = vld [vmem:[%s112 + $0x30] sm:$0xff]
      %v127 = vld [vmem:[%s112 + $0x38] sm:$0xff]
      %v128 = vld [vmem:[%s112 + $0x40] sm:$0xff]
      %v129 = vld [vmem:[%s112 + $0x48] sm:$0xff]
      %v130 = vld [vmem:[%s112 + $0x50] sm:$0xff]
      %v131 = vld [vmem:[%s112 + $0x58] sm:$0xff]
      %v132 = vld [vmem:[%s112 + $0x60] sm:$0xff]
      %v133 = vld [vmem:[%s112 + $0x68] sm:$0xff]
      %v134 = vld [vmem:[%s112 + $0x70] sm:$0xff]
      %v135 = vld [vmem:[%s112 + $0x78] sm:$0xff]
      %vm136 = vcmask 130048
      %v137 = vsel %vm136, %v120, 0.0
      %138 = vadd.xlane.f32.xlu0 %v137
      %v139 = vpop.xlane.xlu0 %138
      %v140 = vsel %vm136, %v121, 0.0
      %141 = vadd.xlane.f32.xlu0 %v140
      %v142 = vpop.xlane.xlu0 %141
      %v143 = vsel %vm136, %v122, 0.0
      %144 = vadd.xlane.f32.xlu0 %v143
      %v145 = vpop.xlane.xlu0 %144
      %v146 = vsel %vm136, %v123, 0.0
      %147 = vadd.xlane.f32.xlu0 %v146
      %v148 = vpop.xlane.xlu0 %147
      %v149 = vsel %vm136, %v124, 0.0
      %150 = vadd.xlane.f32.xlu0 %v149
      %v151 = vpop.xlane.xlu0 %150
      %v152 = vsel %vm136, %v125, 0.0
      %153 = vadd.xlane.f32.xlu0 %v152
      %v154 = vpop.xlane.xlu0 %153
      %v155 = vsel %vm136, %v126, 0.0
      %156 = vadd.xlane.f32.xlu0 %v155
      %v157 = vpop.xlane.xlu0 %156
      %v158 = vsel %vm136, %v127, 0.0
      %159 = vadd.xlane.f32.xlu0 %v158
      %v160 = vpop.xlane.xlu0 %159
      %v161 = vsel %vm136, %v128, 0.0
      %162 = vadd.xlane.f32.xlu0 %v161
      %v163 = vpop.xlane.xlu0 %162
      %v164 = vsel %vm136, %v129, 0.0
      %165 = vadd.xlane.f32.xlu0 %v164
      %v166 = vpop.xlane.xlu0 %165
      %v167 = vsel %vm136, %v130, 0.0
      %168 = vadd.xlane.f32.xlu0 %v167
      %v169 = vpop.xlane.xlu0 %168
      %v170 = vsel %vm136, %v131, 0.0
      %171 = vadd.xlane.f32.xlu0 %v170
      %v172 = vpop.xlane.xlu0 %171
      %v173 = vsel %vm136, %v132, 0.0
      %174 = vadd.xlane.f32.xlu0 %v173
      %v175 = vpop.xlane.xlu0 %174
      %v176 = vsel %vm136, %v133, 0.0
      %177 = vadd.xlane.f32.xlu0 %v176
      %v178 = vpop.xlane.xlu0 %177
      %v179 = vsel %vm136, %v134, 0.0
      %180 = vadd.xlane.f32.xlu0 %v179
      %v181 = vpop.xlane.xlu0 %180
      %v182 = vsel %vm136, %v135, 0.0
      %183 = vadd.xlane.f32.xlu0 %v182
      %v184 = vpop.xlane.xlu0 %183
      %v185 = vrcp.pop 16.0
      %v186 = vmul.f32 %v139, %v185
      %v187 = vmul.f32 %v142, %v185
      %v188 = vmul.f32 %v145, %v185
      %v189 = vmul.f32 %v148, %v185
      %v190 = vmul.f32 %v151, %v185
      %v191 = vmul.f32 %v154, %v185
      %v192 = vmul.f32 %v157, %v185
      %v193 = vmul.f32 %v160, %v185
      %v194 = vmul.f32 %v163, %v185
      %v195 = vmul.f32 %v166, %v185
      %v196 = vmul.f32 %v169, %v185
      %v197 = vmul.f32 %v172, %v185
      %v198 = vmul.f32 %v175, %v185
      %v199 = vmul.f32 %v178, %v185
      %v200 = vmul.f32 %v181, %v185
      %v201 = vmul.f32 %v184, %v185
      %v202 = vcvt.f32.s32.to.zero.pseudo %v186
      %v203 = vcvt.f32.s32.to.zero.pseudo %v187
      %v204 = vcvt.f32.s32.to.zero.pseudo %v188
      %v205 = vcvt.f32.s32.to.zero.pseudo %v189
      %v206 = vcvt.f32.s32.to.zero.pseudo %v190
      %v207 = vcvt.f32.s32.to.zero.pseudo %v191
      %v208 = vcvt.f32.s32.to.zero.pseudo %v192
      %v209 = vcvt.f32.s32.to.zero.pseudo %v193
      %v210 = vcvt.f32.s32.to.zero.pseudo %v194
      %v211 = vcvt.f32.s32.to.zero.pseudo %v195
      %v212 = vcvt.f32.s32.to.zero.pseudo %v196
      %v213 = vcvt.f32.s32.to.zero.pseudo %v197
      %v214 = vcvt.f32.s32.to.zero.pseudo %v198
      %v215 = vcvt.f32.s32.to.zero.pseudo %v199
      %v216 = vcvt.f32.s32.to.zero.pseudo %v200
      %v217 = vcvt.f32.s32.to.zero.pseudo %v201
      %vm218 = vcmp.gt.s32.totalorder %v202, 0
      %v219 = vsel %vm218, %v202, 0
      %vm220 = vcmp.gt.s32.totalorder %v203, 0
      %v221 = vsel %vm220, %v203, 0
      %vm222 = vcmp.gt.s32.totalorder %v204, 0
      %v223 = vsel %vm222, %v204, 0
      %vm224 = vcmp.gt.s32.totalorder %v205, 0
      %v225 = vsel %vm224, %v205, 0
      %vm226 = vcmp.gt.s32.totalorder %v206, 0
      %v227 = vsel %vm226, %v206, 0
      %vm228 = vcmp.gt.s32.totalorder %v207, 0
      %v229 = vsel %vm228, %v207, 0
      %vm230 = vcmp.gt.s32.totalorder %v208, 0
      %v231 = vsel %vm230, %v208, 0
      %vm232 = vcmp.gt.s32.totalorder %v209, 0
      %v233 = vsel %vm232, %v209, 0
      %vm234 = vcmp.gt.s32.totalorder %v210, 0
      %v235 = vsel %vm234, %v210, 0
      %vm236 = vcmp.gt.s32.totalorder %v211, 0
      %v237 = vsel %vm236, %v211, 0
      %vm238 = vcmp.gt.s32.totalorder %v212, 0
      %v239 = vsel %vm238, %v212, 0
      %vm240 = vcmp.gt.s32.totalorder %v213, 0
      %v241 = vsel %vm240, %v213, 0
      %vm242 = vcmp.gt.s32.totalorder %v214, 0
      %v243 = vsel %vm242, %v214, 0
      %vm244 = vcmp.gt.s32.totalorder %v215, 0
      %v245 = vsel %vm244, %v215, 0
      %vm246 = vcmp.gt.s32.totalorder %v216, 0
      %v247 = vsel %vm246, %v216, 0
      %vm248 = vcmp.gt.s32.totalorder %v217, 0
      %v249 = vsel %vm248, %v217, 0
      %vm250 = vcmp.lt.s32.totalorder %v219, 63
      %v251 = vsel %vm250, %v219, 63
      %vm252 = vcmp.lt.s32.totalorder %v221, 63
      %v253 = vsel %vm252, %v221, 63
      %vm254 = vcmp.lt.s32.totalorder %v223, 63
      %v255 = vsel %vm254, %v223, 63
      %vm256 = vcmp.lt.s32.totalorder %v225, 63
      %v257 = vsel %vm256, %v225, 63
      %vm258 = vcmp.lt.s32.totalorder %v227, 63
      %v259 = vsel %vm258, %v227, 63
      %vm260 = vcmp.lt.s32.totalorder %v229, 63
      %v261 = vsel %vm260, %v229, 63
      %vm262 = vcmp.lt.s32.totalorder %v231, 63
      %v263 = vsel %vm262, %v231, 63
      %vm264 = vcmp.lt.s32.totalorder %v233, 63
      %v265 = vsel %vm264, %v233, 63
      %vm266 = vcmp.lt.s32.totalorder %v235, 63
      %v267 = vsel %vm266, %v235, 63
      %vm268 = vcmp.lt.s32.totalorder %v237, 63
      %v269 = vsel %vm268, %v237, 63
      %vm270 = vcmp.lt.s32.totalorder %v239, 63
      %v271 = vsel %vm270, %v239, 63
      %vm272 = vcmp.lt.s32.totalorder %v241, 63
      %v273 = vsel %vm272, %v241, 63
      %vm274 = vcmp.lt.s32.totalorder %v243, 63
      %v275 = vsel %vm274, %v243, 63
      %vm276 = vcmp.lt.s32.totalorder %v245, 63
      %v277 = vsel %vm276, %v245, 63
      %vm278 = vcmp.lt.s32.totalorder %v247, 63
      %v279 = vsel %vm278, %v247, 63
      %vm280 = vcmp.lt.s32.totalorder %v249, 63
      %v281 = vsel %vm280, %v249, 63
      %vm282 = vcmask 7168
      %283 = vst.msk [vmem:[%s118] sm:$0xff] %vm282, %v251
      %284 = vst.msk [vmem:[%s118 + $0x8] sm:$0xff] %vm282, %v253
      %285 = vst.msk [vmem:[%s118 + $0x10] sm:$0xff] %vm282, %v255
      %286 = vst.msk [vmem:[%s118 + $0x18] sm:$0xff] %vm282, %v257
      %287 = vst.msk [vmem:[%s118 + $0x20] sm:$0xff] %vm282, %v259
      %288 = vst.msk [vmem:[%s118 + $0x28] sm:$0xff] %vm282, %v261
      %289 = vst.msk [vmem:[%s118 + $0x30] sm:$0xff] %vm282, %v263
      %290 = vst.msk [vmem:[%s118 + $0x38] sm:$0xff] %vm282, %v265
      %291 = vst.msk [vmem:[%s118 + $0x40] sm:$0xff] %vm282, %v267
      %292 = vst.msk [vmem:[%s118 + $0x48] sm:$0xff] %vm282, %v269
      %293 = vst.msk [vmem:[%s118 + $0x50] sm:$0xff] %vm282, %v271
      %294 = vst.msk [vmem:[%s118 + $0x58] sm:$0xff] %vm282, %v273
      %295 = vst.msk [vmem:[%s118 + $0x60] sm:$0xff] %vm282, %v275
      %296 = vst.msk [vmem:[%s118 + $0x68] sm:$0xff] %vm282, %v277
      %297 = vst.msk [vmem:[%s118 + $0x70] sm:$0xff] %vm282, %v279
      %298 = vst.msk [vmem:[%s118 + $0x78] sm:$0xff] %vm282, %v281
      %s299 = smul.u32 16, %s12
      %p300 = scmp.lt.s32.totalorder %s299, 31
      %s301 = scalar_select %p300, %s299, 31
      %s302 = smul.addr %s301, 8
      %s303 = scalar_lea.vmem %s1, %s302
      // Predicated region
      $region25: #{tpu_custom_call.1} parent=23 // pred_check
        %p304 = pneg %p56
      $region26: #{tpu_custom_call.1} parent=23 // pred_check_branch
        %306 = sbr.rel (%p304) target = $region28
      $region27: #{tpu_custom_call.1} parent=23 // pred_region
        %s307 = smul.u32 16, %s12
      $region28: #{tpu_custom_call.1} parent=23 // pred_fallthru
        _
    $region24: #{tpu_custom_call.1} parent=5 // pred_fallthru
      _
    %p308 = scmp.le.s32.totalorder 2, %s7
    // Predicated region
    $region29: #{tpu_custom_call.1} parent=5 // pred_check
      %p309 = pneg %p308
    $region30: #{tpu_custom_call.1} parent=5 // pred_check_branch
      %311 = sbr.rel (%p309) target = $region32
    $region31: #{tpu_custom_call.1} parent=5 // pred_region
      %s312 = ssub.s32 %s7, 2
      // Predicated region
      $region33: #{tpu_custom_call.1} parent=31 // pred_check
        %p313 = pneg %p62
      $region34: #{tpu_custom_call.1} parent=31 // pred_check_branch
        %315 = sbr.rel (%p313) target = $region36
      $region35: #{tpu_custom_call.1} parent=31 // pred_region
        %s316 = smul.u32 16, %s13
        %p317 = scmp.lt.s32.totalorder %s316, 31
        %s318 = scalar_select %p317, %s316, 31
        %s319 = smul.addr %s318, 8
        %s320 = scalar_lea.vmem %s1, %s319
      $region36: #{tpu_custom_call.1} parent=31 // pred_fallthru
        _
    $region32: #{tpu_custom_call.1} parent=5 // pred_fallthru
      _
  $region6: #{tpu_custom_call.1} parent=0 // loop_footer
    %s11 = sadd.s32 1, %s7
  $region7: #{tpu_custom_call.1} parent=0 // loop_footer_branch
    %6 = sbr.rel target = $region3
  $region8: #{tpu_custom_call.1} parent=0 // loop_exit
    _

</llo_original>
